<compile_context>
chip_gen: v5e
topology: v5e:2x2
jax: 0.10.0
libtpu: 0.0.40
codegen_flags: <defaults>
</compile_context>

<pallas_src>
import functools
import math

import jax
import jax.numpy as jnp
from jax.experimental import pallas as pl
from jax.experimental.pallas import tpu as pltpu


def ortho_norm(weight):
    """JAX port of the PyTorch ortho_norm: W @ inv(chol(W^T W + 1e-4 I))^T.

    Cholesky / triangular solve have no Pallas TPU equivalent, so this runs as
    ordinary (host-compiled) JAX before the kernel — exactly as the PyTorch
    module recomputes it per forward call.
    """
    d = weight.shape[1]
    wtw = weight.T @ weight + 1e-4 * jnp.eye(d, dtype=weight.dtype)
    L = jnp.linalg.cholesky(wtw)
    # W @ inv(L).T == (inv(L) @ W.T).T — triangular solve instead of explicit inverse.
    return jax.scipy.linalg.solve_triangular(L, weight.T, lower=True).T


def gcn_kernel(adj_ref, x_ref, h0_ref, w_ref, o_ref, acc_ref, *,
               alpha, one_minus_theta):
    k = pl.program_id(1)

    @pl.when(k == 0)
    def _():
        acc_ref[...] = jnp.zeros_like(acc_ref)

    # hi[row tile] += adj[row tile, k tile] @ x[k tile]   (MXU, f32 accumulation)
    acc_ref[...] += jnp.dot(adj_ref[...], x_ref[...],
                            preferred_element_type=jnp.float32)

    @pl.when(k == pl.num_programs(1) - 1)
    def _():
        hi = acc_ref[...]
        support = (1.0 - alpha) * hi + alpha * h0_ref[...]
        # theta is pre-folded into w_ref on the host (w_ref = theta * W_ortho),
        # so the epilogue is one MXU matmul + a fused scale-add + tanh (EUP).
        out = jnp.dot(support, w_ref[...], preferred_element_type=jnp.float32)
        out = out + one_minus_theta * support
        o_ref[...] = jnp.tanh(out).astype(o_ref.dtype)


def graph_convolution(x, adj, h0, weight, *, lamda, alpha, l,
                      tile_n=128, tile_k=128):
    """x, h0: (N, D) f32; adj: (N, N) f32 (dense normalized adjacency);
    weight: (D, D) f32 (non-variant => in_features == out_features)."""
    N, D = x.shape
    assert adj.shape == (N, N) and h0.shape == (N, D) and weight.shape == (D, D)
    assert N % tile_n == 0 and N % tile_k == 0, "pad N to a multiple of the tiles"
    assert D % 128 == 0, "keep the feature dim lane-dense (multiple of 128)"

    theta = math.log(lamda / l + 1.0)
    w_scaled = (theta * ortho_norm(weight)).astype(jnp.float32)

    kernel = functools.partial(gcn_kernel,
                               alpha=float(alpha),
                               one_minus_theta=float(1.0 - theta))

    return pl.pallas_call(
        kernel,
        out_shape=jax.ShapeDtypeStruct((N, D), x.dtype),
        grid_spec=pltpu.PrefetchScalarGridSpec(
            num_scalar_prefetch=0,
            grid=(N // tile_n, N // tile_k),
            in_specs=[
                pl.BlockSpec((tile_n, tile_k), lambda i, k: (i, k)),  # adj tile
                pl.BlockSpec((tile_k, D), lambda i, k: (k, 0)),        # x rows (K axis)
                pl.BlockSpec((tile_n, D), lambda i, k: (i, 0)),        # h0 rows
                pl.BlockSpec((D, D), lambda i, k: (0, 0)),             # weight (resident)
            ],
            out_specs=pl.BlockSpec((tile_n, D), lambda i, k: (i, 0)),
            scratch_shapes=[pltpu.VMEM((tile_n, D), jnp.float32)],
        ),
        compiler_params=pltpu.CompilerParams(
            dimension_semantics=("parallel", "arbitrary")),
    )(adj, x, h0, w_scaled)


def reference_graph_convolution(x, adj, h0, weight, *, lamda, alpha, l):
    w_ortho = ortho_norm(weight)
    theta = math.log(lamda / l + 1.0)
    hi = adj @ x
    support = (1.0 - alpha) * hi + alpha * h0
    out = theta * (support @ w_ortho) + (1.0 - theta) * support
    return jnp.tanh(out)


if __name__ == "__main__":
    # Small but lane-dense shapes: 256 nodes, 128 features.
    N, D = 256, 128
    lamda, alpha, l = 0.5, 0.1, 1

    key = jax.random.PRNGKey(0)
    k_adj, k_x, k_h0, k_w = jax.random.split(key, 4)

    # Row-normalized dense adjacency (torch.spmm == dense matmul semantically).
    a = jax.random.uniform(k_adj, (N, N), jnp.float32)
    adj = a / jnp.sum(a, axis=-1, keepdims=True)

    x = jax.random.normal(k_x, (N, D), jnp.float32)
    h0 = jax.random.normal(k_h0, (N, D), jnp.float32)

    # glorot_init from the module: uniform(-r, r), r = sqrt(6 / (in + out)).
    init_range = math.sqrt(6.0 / (D + D))
    weight = jax.random.uniform(k_w, (D, D), jnp.float32, -init_range, init_range)

    out = graph_convolution(x, adj, h0, weight, lamda=lamda, alpha=alpha, l=l)
    out = jax.block_until_ready(out)

    ref = reference_graph_convolution(x, adj, h0, weight,
                                      lamda=lamda, alpha=alpha, l=l)
    assert out.shape == (N, D)
    assert jnp.allclose(out, ref, atol=2e-5, rtol=2e-5), \
        float(jnp.max(jnp.abs(out - ref)))

    print("KERNEL_OK")
</pallas_src>

<mosaic_0001>
module attributes {stable_mosaic.version = 11 : i64} {
  func.func @gcn_kernel(%arg0: i32, %arg1: i32, %arg2: memref<128x128xf32, #tpu.memory_space<vmem>>, %arg3: memref<128x128xf32, #tpu.memory_space<vmem>>, %arg4: memref<128x128xf32, #tpu.memory_space<vmem>>, %arg5: memref<128x128xf32, #tpu.memory_space<vmem>>, %arg6: memref<128x128xf32, #tpu.memory_space<vmem>>, %arg7: memref<128x128xf32, #tpu.memory_space<vmem>>) attributes {dimension_semantics = [#tpu.dimension_semantics<parallel>, #tpu.dimension_semantics<arbitrary>], iteration_bounds = array<i64: 2, 2>, scalar_prefetch = 0 : i64, scratch_operands = 1 : i64, tpu.core_type = #tpu.core_type<tc>, window_params = [{transform_indices = @transform_0, window_bounds = array<i64: 128, 128>}, {transform_indices = @transform_1, window_bounds = array<i64: 128, 128>}, {transform_indices = @transform_2, window_bounds = array<i64: 128, 128>}, {pipeline_mode = #tpu.pipeline_mode<synchronous>, transform_indices = @transform_3, window_bounds = array<i64: 128, 128>}, {transform_indices = @transform_4, window_bounds = array<i64: 128, 128>}]} {
    %c0_i32 = arith.constant 0 : i32
    %0 = arith.cmpi eq, %arg1, %c0_i32 : i32
    %1 = arith.extui %0 : i1 to i32
    %c0_i32_0 = arith.constant 0 : i32
    %2 = arith.cmpi ne, %1, %c0_i32_0 : i32
    scf.if %2 {
      %cst_9 = arith.constant 0.000000e+00 : f32
      %12 = vector.broadcast %cst_9 : f32 to vector<128x128xf32>
      %c0_10 = arith.constant 0 : index
      %c0_11 = arith.constant 0 : index
      %13 = vector.load %arg7[%c0_10, %c0_11] : memref<128x128xf32, #tpu.memory_space<vmem>>, vector<128x128xf32>
      tpu.vector_store %arg7[%c0_10, %c0_11], %12 {strides = array<i32>} : memref<128x128xf32, #tpu.memory_space<vmem>>, vector<128x128xf32>,
    } else {
    }
    %c0 = arith.constant 0 : index
    %c0_1 = arith.constant 0 : index
    %3 = vector.load %arg7[%c0, %c0_1] : memref<128x128xf32, #tpu.memory_space<vmem>>, vector<128x128xf32>
    %c0_2 = arith.constant 0 : index
    %c0_3 = arith.constant 0 : index
    %4 = vector.load %arg2[%c0_2, %c0_3] : memref<128x128xf32, #tpu.memory_space<vmem>>, vector<128x128xf32>
    %c0_4 = arith.constant 0 : index
    %c0_5 = arith.constant 0 : index
    %5 = vector.load %arg3[%c0_4, %c0_5] : memref<128x128xf32, #tpu.memory_space<vmem>>, vector<128x128xf32>
    %cst = arith.constant dense<0.000000e+00> : vector<128x128xf32>
    %6 = tpu.matmul %4, %5, %cst {dimension_numbers = #tpu.dot_dimension_numbers<[1], [0], [0], [1], [0, 0, 1, 1], [], []>} : vector<128x128xf32>, vector<128x128xf32>, vector<128x128xf32> -> vector<128x128xf32>
    %7 = arith.addf %3, %6 : vector<128x128xf32>
    %c0_6 = arith.constant 0 : index
    %c0_7 = arith.constant 0 : index
    %8 = vector.load %arg7[%c0_6, %c0_7] : memref<128x128xf32, #tpu.memory_space<vmem>>, vector<128x128xf32>
    tpu.vector_store %arg7[%c0_6, %c0_7], %7 {strides = array<i32>} : memref<128x128xf32, #tpu.memory_space<vmem>>, vector<128x128xf32>,
    %c1_i32 = arith.constant 1 : i32
    %9 = arith.cmpi eq, %arg1, %c1_i32 : i32
    %10 = arith.extui %9 : i1 to i32
    %c0_i32_8 = arith.constant 0 : i32
    %11 = arith.cmpi ne, %10, %c0_i32_8 : i32
    scf.if %11 {
      %c0_9 = arith.constant 0 : index
      %c0_10 = arith.constant 0 : index
      %12 = vector.load %arg7[%c0_9, %c0_10] : memref<128x128xf32, #tpu.memory_space<vmem>>, vector<128x128xf32>
      %cst_11 = arith.constant 0.899999976 : f32
      %13 = vector.broadcast %cst_11 : f32 to vector<128x128xf32>
      %14 = arith.mulf %13, %12 : vector<128x128xf32>
      %c0_12 = arith.constant 0 : index
      %c0_13 = arith.constant 0 : index
      %15 = vector.load %arg4[%c0_12, %c0_13] : memref<128x128xf32, #tpu.memory_space<vmem>>, vector<128x128xf32>
      %cst_14 = arith.constant 1.000000e-01 : f32
      %16 = vector.broadcast %cst_14 : f32 to vector<128x128xf32>
      %17 = arith.mulf %16, %15 : vector<128x128xf32>
      %18 = arith.addf %14, %17 : vector<128x128xf32>
      %c0_15 = arith.constant 0 : index
      %c0_16 = arith.constant 0 : index
      %19 = vector.load %arg5[%c0_15, %c0_16] : memref<128x128xf32, #tpu.memory_space<vmem>>, vector<128x128xf32>
      %cst_17 = arith.constant dense<0.000000e+00> : vector<128x128xf32>
      %20 = tpu.matmul %18, %19, %cst_17 {dimension_numbers = #tpu.dot_dimension_numbers<[1], [0], [0], [1], [0, 0, 1, 1], [], []>} : vector<128x128xf32>, vector<128x128xf32>, vector<128x128xf32> -> vector<128x128xf32>
      %cst_18 = arith.constant 0.594534874 : f32
      %21 = vector.broadcast %cst_18 : f32 to vector<128x128xf32>
      %22 = arith.mulf %21, %18 : vector<128x128xf32>
      %23 = arith.addf %20, %22 : vector<128x128xf32>
      %24 = math.tanh %23 : vector<128x128xf32>
      %c0_19 = arith.constant 0 : index
      %c0_20 = arith.constant 0 : index
      %25 = vector.load %arg6[%c0_19, %c0_20] : memref<128x128xf32, #tpu.memory_space<vmem>>, vector<128x128xf32>
      tpu.vector_store %arg6[%c0_19, %c0_20], %24 {strides = array<i32>} : memref<128x128xf32, #tpu.memory_space<vmem>>, vector<128x128xf32>,
    } else {
    }
    return
  }
  func.func @transform_0(%arg0: i32, %arg1: i32) -> (i32, i32) {
    %c0_i32 = arith.constant 0 : i32
    return %arg0, %arg1 : i32, i32
  }
  func.func @transform_1(%arg0: i32, %arg1: i32) -> (i32, i32) {
    %c0_i32 = arith.constant 0 : i32
    %c0_i32_0 = arith.constant 0 : i32
    return %arg1, %c0_i32 : i32, i32
  }
  func.func @transform_2(%arg0: i32, %arg1: i32) -> (i32, i32) {
    %c0_i32 = arith.constant 0 : i32
    %c0_i32_0 = arith.constant 0 : i32
    return %arg0, %c0_i32 : i32, i32
  }
  func.func @transform_3(%arg0: i32, %arg1: i32) -> (i32, i32) {
    %c0_i32 = arith.constant 0 : i32
    %c0_i32_0 = arith.constant 0 : i32
    %c0_i32_1 = arith.constant 0 : i32
    return %c0_i32, %c0_i32_0 : i32, i32
  }
  func.func @transform_4(%arg0: i32, %arg1: i32) -> (i32, i32) {
    %c0_i32 = arith.constant 0 : i32
    %c0_i32_0 = arith.constant 0 : i32
    return %arg0, %c0_i32 : i32, i32
  }
}

</mosaic_0001>

<llo_original>
// kernel: tpu_custom_call.1
$region0: #{tpu_custom_call.1}
  #allocation0 [shape = 'u32[]', space=smem, size = 0x4, offset = 0x4, fixed_abs, tag = 'smem constant byte address 0x4 - core index']
  #allocation1 [shape = 'u32[72,128]{1,0:T(1,128)}', space=vmem, size = 0x9000, scoped, tag = 'internal scratch']
  #allocation2 [shape = 'f32[128,128]{1,0:T(8,128)}', space=vmem, size = 0x10000, scoped, tag = 'scratch operand']
  %s0 = inlined_call_operand.hbm [shape: f32[256,256], index: 0, kind: input, shape index: {}]
  %s1 = inlined_call_operand.hbm [shape: f32[256,128], index: 1, kind: input, shape index: {}]
  %s2 = inlined_call_operand.hbm [shape: f32[256,128], index: 2, kind: input, shape index: {}]
  %s3 = inlined_call_operand.hbm [shape: f32[128,128], index: 3, kind: input, shape index: {}]
  %s4 = inlined_call_operand.hbm [shape: f32[256,128], index: 4, kind: output, shape index: {}]
  %s5 = sld [smem:[#allocation0]]
  $region73: #{tpu_custom_call.1} parent=0
    _
  %s7 = ssub.s32 1, %s5
  %s8 = scalar_select 0, %s7, %s5
  $region1: #{tpu_custom_call.1} parent=0
    #allocation3 [shape = 'u8[131072]{0}', space=vmem, size = 0x20000, scoped, tag = 'input window, operand 0']
    #allocation4 [shape = 's32[2]{0}', space=sflag, size = 0x8, scoped, tag = 'scoped memory for tpu_custom_call.1']
    #allocation5 [shape = 's32[2]{0}', space=sflag, size = 0x8, scoped, tag = 'scoped memory for tpu_custom_call.1']
    #allocation6 [shape = 'u8[131072]{0}', space=vmem, size = 0x20000, scoped, tag = 'input window, operand 1']
    #allocation7 [shape = 's32[2]{0}', space=sflag, size = 0x8, scoped, tag = 'scoped memory for tpu_custom_call.1']
    #allocation8 [shape = 'u8[131072]{0}', space=vmem, size = 0x20000, scoped, tag = 'input window, operand 2']
    #allocation9 [shape = 'u8[65536]{0}', space=vmem, size = 0x10000, scoped, tag = 'input window, operand 3, single buffered']
    #allocation10 [shape = 's32[1]{0}', space=sflag, size = 0x4, scoped, tag = 'scoped memory for tpu_custom_call.1']
    #allocation11 [shape = 'u8[131072]{0}', space=vmem, size = 0x20000, scoped, tag = 'output window, operand 0']
    %9 = vsyncpa [#allocation4], 0
    %s10 = scalar_lea.sflag [#allocation4], 1
    %11 = vsyncpa %s10, 0
    %12 = vsyncpa [#allocation7], 0
    %s13 = scalar_lea.sflag [#allocation7], 1
    %14 = vsyncpa %s13, 0
    %15 = vsyncpa [#allocation10], 0
    %16 = vsyncpa [#allocation5], 0
    %s17 = scalar_lea.sflag [#allocation5], 1
    %18 = vsyncpa %s17, 0
    loop: start=0, step=1, limit=6
    $region2: #{tpu_custom_call.1} parent=1 // loop_pre_header
      _
    $region3: #{tpu_custom_call.1} parent=1 // loop_header
      %s20 = sphi 0, %s24
      %p21 = scmp.ge.s32.totalorder %s20, 6
      %s27 = sphi 0, %s39
      %s28 = sphi 0, %s35
      %s29 = sphi 0, %s27
      %s30 = sphi 0, %s28
      %s31 = sphi 0, %s29
      %s32 = sphi 0, %s30
      %s44 = sphi 0, %s46
      %s47 = sphi 0, %s44
      %s48 = sphi 0, %s47
      %s64 = sphi 0, %s48
      %s70 = sphi 0, %s72
      %s73 = sphi 0, %s70
      %s74 = sphi 0, %s73
      %s90 = sphi 0, %s74
      %s96 = sphi 0, %s98
      %s99 = sphi 0, %s96
      %s100 = sphi 0, %s99
      %s116 = sphi 0, %s100
      %s120 = sphi 0, %s120
      %s122 = sphi 0, %s120
      %s123 = sphi 0, %s122
      %s137 = sphi 0, %s123
      %s143 = sphi 0, %s145
      %s146 = sphi 0, %s143
      %s147 = sphi 0, %s146
      %s163 = sphi 0, %s147
    $region4: #{tpu_custom_call.1} parent=1 // loop_header_branch
      %23 = sbr.rel (%p21) target = $region8
    $region5: #{tpu_custom_call.1} parent=1 // loop_body
      %s25 = ssub.s32 %s20, 1
      %s26 = ssub.s32 %s20, 2
      %s33 = sadd.s32 1, %s28
      %p34 = scmp.ge.s32.totalorder %s33, 2
      %s35 = scalar_select %p34, 0, %s33
      %s36 = sadd.s32 1, %s27
      %s37 = scalar_select %p34, %s36, %s27
      %p38 = scmp.ge.s32.totalorder %s37, 2
      %s39 = scalar_select %p38, 0, %s37
      %s40 = ssub.s32 %s27, %s39
      %s41 = ssub.s32 %s28, %s35
      %s42 = sor.u32 %s40, %s41
      %p43 = scmp.eq.s32.totalorder %s42, 0
      %s45 = sadd.s32 %s44, 1
      %s46 = scalar_select %p43, %s44, %s45
      %p49 = pneg %p43
      %p50 = scmp.eq.s32.totalorder %s20, 3
      %p51 = por %p49, %p50
      %p52 = scmp.ne.s32.totalorder %s44, %s47
      %p53 = scmp.eq.s32.totalorder %s20, 0
      %p54 = por %p52, %p53
      %p55 = scmp.ne.s32.totalorder %s44, %s47
      %p56 = scmp.eq.s32.totalorder %s25, 3
      %p57 = por %p55, %p56
      %p58 = scmp.ne.s32.totalorder %s47, %s48
      %p59 = scmp.eq.s32.totalorder %s25, 0
      %p60 = por %p58, %p59
      %p61 = scmp.ne.s32.totalorder %s47, %s48
      %p62 = scmp.eq.s32.totalorder %s26, 3
      %p63 = por %p61, %p62
      %p65 = scmp.ne.s32.totalorder %s48, %s64
      %p66 = scmp.eq.s32.totalorder %s26, 0
      %p67 = por %p65, %p66
      %s68 = ssub.s32 %s28, %s35
      %p69 = scmp.eq.s32.totalorder %s68, 0
      %s71 = sadd.s32 %s70, 1
      %s72 = scalar_select %p69, %s70, %s71
      %p75 = pneg %p69
      %p76 = scmp.eq.s32.totalorder %s20, 3
      %p77 = por %p75, %p76
      %p78 = scmp.ne.s32.totalorder %s70, %s73
      %p79 = scmp.eq.s32.totalorder %s20, 0
      %p80 = por %p78, %p79
      %p81 = scmp.ne.s32.totalorder %s70, %s73
      %p82 = scmp.eq.s32.totalorder %s25, 3
      %p83 = por %p81, %p82
      %p84 = scmp.ne.s32.totalorder %s73, %s74
      %p85 = scmp.eq.s32.totalorder %s25, 0
      %p86 = por %p84, %p85
      %p87 = scmp.ne.s32.totalorder %s73, %s74
      %p88 = scmp.eq.s32.totalorder %s26, 3
      %p89 = por %p87, %p88
      %p91 = scmp.ne.s32.totalorder %s74, %s90
      %p92 = scmp.eq.s32.totalorder %s26, 0
      %p93 = por %p91, %p92
      %s94 = ssub.s32 %s27, %s39
      %p95 = scmp.eq.s32.totalorder %s94, 0
      %s97 = sadd.s32 %s96, 1
      %s98 = scalar_select %p95, %s96, %s97
      %p101 = pneg %p95
      %p102 = scmp.eq.s32.totalorder %s20, 3
      %p103 = por %p101, %p102
      %p104 = scmp.ne.s32.totalorder %s96, %s99
      %p105 = scmp.eq.s32.totalorder %s20, 0
      %p106 = por %p104, %p105
      %p107 = scmp.ne.s32.totalorder %s96, %s99
      %p108 = scmp.eq.s32.totalorder %s25, 3
      %p109 = por %p107, %p108
      %p110 = scmp.ne.s32.totalorder %s99, %s100
      %p111 = scmp.eq.s32.totalorder %s25, 0
      %p112 = por %p110, %p111
      %p113 = scmp.ne.s32.totalorder %s99, %s100
      %p114 = scmp.eq.s32.totalorder %s26, 3
      %p115 = por %p113, %p114
      %p117 = scmp.ne.s32.totalorder %s100, %s116
      %p118 = scmp.eq.s32.totalorder %s26, 0
      %p119 = por %p117, %p118
      %s121 = sadd.s32 %s120, 1
      %p124 = scmp.eq.s32.totalorder %s20, 3
      %p125 = scmp.ne.s32.totalorder %s120, %s122
      %p126 = scmp.eq.s32.totalorder %s20, 0
      %p127 = por %p125, %p126
      %p128 = scmp.ne.s32.totalorder %s120, %s122
      %p129 = scmp.eq.s32.totalorder %s25, 3
      %p130 = por %p128, %p129
      %p131 = scmp.ne.s32.totalorder %s122, %s123
      %p132 = scmp.eq.s32.totalorder %s25, 0
      %p133 = por %p131, %p132
      %p134 = scmp.ne.s32.totalorder %s122, %s123
      %p135 = scmp.eq.s32.totalorder %s26, 3
      %p136 = por %p134, %p135
      %p138 = scmp.ne.s32.totalorder %s123, %s137
      %p139 = scmp.eq.s32.totalorder %s26, 0
      %p140 = por %p138, %p139
      %s141 = ssub.s32 %s27, %s39
      %p142 = scmp.eq.s32.totalorder %s141, 0
      %s144 = sadd.s32 %s143, 1
      %s145 = scalar_select %p142, %s143, %s144
      %p148 = pneg %p142
      %p149 = scmp.eq.s32.totalorder %s20, 3
      %p150 = por %p148, %p149
      %p151 = scmp.ne.s32.totalorder %s143, %s146
      %p152 = scmp.eq.s32.totalorder %s20, 0
      %p153 = por %p151, %p152
      %p154 = scmp.ne.s32.totalorder %s143, %s146
      %p155 = scmp.eq.s32.totalorder %s25, 3
      %p156 = por %p154, %p155
      %p157 = scmp.ne.s32.totalorder %s146, %s147
      %p158 = scmp.eq.s32.totalorder %s25, 0
      %p159 = por %p157, %p158
      %p160 = scmp.ne.s32.totalorder %s146, %s147
      %p161 = scmp.eq.s32.totalorder %s26, 3
      %p162 = por %p160, %p161
      %p164 = scmp.ne.s32.totalorder %s147, %s163
      %p165 = scmp.eq.s32.totalorder %s26, 0
      %p166 = por %p164, %p165
      %p167 = scmp.le.s32.totalorder 1, %s20
      %p168 = scmp.lt.s32.totalorder %s20, 5
      %p169 = pnand %p167, %p168
      %p170 = pneg %p169
      // Predicated region
      $region9: #{tpu_custom_call.1} parent=5 // pred_check
        _
      $region10: #{tpu_custom_call.1} parent=5 // pred_check_branch
        %172 = sbr.rel (%p169) target = $region12
      $region11: #{tpu_custom_call.1} parent=5 // pred_region
        %s173 = ssub.s32 %s20, 1
        // Predicated region
        $region13: #{tpu_custom_call.1} parent=11 // pred_check
          %p174 = pneg %p133
        $region14: #{tpu_custom_call.1} parent=11 // pred_check_branch
          %176 = sbr.rel (%p174) target = $region16
        $region15: #{tpu_custom_call.1} parent=11 // pred_region
          %178 = vsyncadd [#allocation10], 0
          %s179 = sshll.u32 %s3, 4
          %s180 = int_to_ptr.hbm [resolvable:$true] %s179
          %s181 = sshll.u32 [#allocation9], 4
          %s182 = int_to_ptr.vmem [resolvable:$true] %s181
          %187 = dma.hbm_to_vmem [thread:$0]  %s180, 2048, %s182, [#allocation10], 128, 128, 8
        $region16: #{tpu_custom_call.1} parent=11 // pred_fallthru
          _
      $region12: #{tpu_custom_call.1} parent=5 // pred_fallthru
        _
      %p188 = scmp.lt.s32.totalorder %s20, 4
      // Predicated region
      $region17: #{tpu_custom_call.1} parent=5 // pred_check
        %p189 = pneg %p188
      $region18: #{tpu_custom_call.1} parent=5 // pred_check_branch
        %191 = sbr.rel (%p189) target = $region20
      $region19: #{tpu_custom_call.1} parent=5 // pred_region
        // Predicated region
        $region21: #{tpu_custom_call.1} parent=19 // pred_check
          %p192 = pneg %p54
        $region22: #{tpu_custom_call.1} parent=19 // pred_check_branch
          %194 = sbr.rel (%p192) target = $region24
        $region23: #{tpu_custom_call.1} parent=19 // pred_region
          %s195 = sand.u32 %s44, 1
          %s196 = scalar_lea.sflag [#allocation4], %s195
          %s197 = sand.u32 %s44, 1
          %s198 = smul.addr %s197, 128
          %s199 = scalar_lea.vmem [#allocation3], %s198
          %s200 = smul.u32 16, %s27
          %202 = vsyncadd %s196, 0
          %s203 = smul.addr %s200, 2
          %s204 = sadd.s32 %s28, %s203
          %s205 = smul.addr %s204, 8
          %s206 = scalar_lea.hbm %s0, %s205
          %s207 = sshll.u32 %s206, 4
          %s208 = int_to_ptr.hbm [resolvable:$true] %s207
          %s209 = sshll.u32 %s199, 4
          %s210 = int_to_ptr.vmem [resolvable:$true] %s209
          %215 = dma.hbm_to_vmem [thread:$0]  %s208, 2048, %s210, %s196, 256, 128, 8
        $region24: #{tpu_custom_call.1} parent=19 // pred_fallthru
          _
        // Predicated region
        $region25: #{tpu_custom_call.1} parent=19 // pred_check
          %p216 = pneg %p80
        $region26: #{tpu_custom_call.1} parent=19 // pred_check_branch
          %218 = sbr.rel (%p216) target = $region28
        $region27: #{tpu_custom_call.1} parent=19 // pred_region
          %s219 = sand.u32 %s20, 1
          %s220 = scalar_lea.sflag [#allocation7], %s219
          %s221 = sand.u32 %s70, 1
          %s222 = smul.addr %s221, 128
          %s223 = scalar_lea.vmem [#allocation6], %s222
          %s224 = smul.u32 16, %s28
          %226 = vsyncadd %s220, 0
          %s227 = smul.addr %s224, 8
          %s228 = scalar_lea.hbm %s1, %s227
          %s229 = sshll.u32 %s228, 4
          %s230 = int_to_ptr.hbm [resolvable:$true] %s229
          %s231 = sshll.u32 %s223, 4
          %s232 = int_to_ptr.vmem [resolvable:$true] %s231
          %237 = dma.hbm_to_vmem [thread:$0]  %s230, 2048, %s232, %s220, 128, 128, 8
        $region28: #{tpu_custom_call.1} parent=19 // pred_fallthru
          _
        // Predicated region
        $region29: #{tpu_custom_call.1} parent=19 // pred_check
          %p238 = pneg %p106
        $region30: #{tpu_custom_call.1} parent=19 // pred_check_branch
          %240 = sbr.rel (%p238) target = $region32
        $region31: #{tpu_custom_call.1} parent=19 // pred_region
          %s241 = sand.u32 %s20, 1
          %s242 = scalar_lea.sflag [#allocation7], %s241
          %s243 = sand.u32 %s96, 1
          %s244 = smul.addr %s243, 128
          %s245 = scalar_lea.vmem [#allocation8], %s244
          %s246 = smul.u32 16, %s27
          %248 = vsyncadd %s242, 0
          %s249 = smul.addr %s246, 8
          %s250 = scalar_lea.hbm %s2, %s249
          %s251 = sshll.u32 %s250, 4
          %s252 = int_to_ptr.hbm [resolvable:$true] %s251
          %s253 = sshll.u32 %s245, 4
          %s254 = int_to_ptr.vmem [resolvable:$true] %s253
          %259 = dma.hbm_to_vmem [thread:$0]  %s252, 2048, %s254, %s242, 128, 128, 8
        $region32: #{tpu_custom_call.1} parent=19 // pred_fallthru
          _
      $region20: #{tpu_custom_call.1} parent=5 // pred_fallthru
        _
      %p260 = scmp.le.s32.totalorder 1, %s20
      %p261 = scmp.lt.s32.totalorder %s20, 5
      %p262 = pnand %p260, %p261
      %p263 = pneg %p262
      // Predicated region
      $region33: #{tpu_custom_call.1} parent=5 // pred_check
        _
      $region34: #{tpu_custom_call.1} parent=5 // pred_check_branch
        %265 = sbr.rel (%p262) target = $region36
      $region35: #{tpu_custom_call.1} parent=5 // pred_region
        %s266 = ssub.s32 %s20, 1
        %s267 = sand.u32 %s47, 1
        %s268 = scalar_lea.sflag [#allocation4], %s267
        %s269 = sand.u32 %s47, 1
        %s270 = smul.addr %s269, 128
        %s271 = scalar_lea.vmem [#allocation3], %s270
        // Predicated region
        $region37: #{tpu_custom_call.1} parent=35 // pred_check
          %p272 = pneg %p60
        $region38: #{tpu_custom_call.1} parent=35 // pred_check_branch
          %274 = sbr.rel (%p272) target = $region40
        $region39: #{tpu_custom_call.1} parent=35 // pred_region
          %276 = dma.done %s268, 2048
        $region40: #{tpu_custom_call.1} parent=35 // pred_fallthru
          _
        %s277 = sand.u32 %s25, 1
        %s278 = scalar_lea.sflag [#allocation7], %s277
        %s279 = sand.u32 %s73, 1
        %s280 = smul.addr %s279, 128
        %s281 = scalar_lea.vmem [#allocation6], %s280
        // Predicated region
        $region41: #{tpu_custom_call.1} parent=35 // pred_check
          %p282 = pneg %p86
        $region42: #{tpu_custom_call.1} parent=35 // pred_check_branch
          %284 = sbr.rel (%p282) target = $region44
        $region43: #{tpu_custom_call.1} parent=35 // pred_region
          %286 = dma.done %s278, 2048
        $region44: #{tpu_custom_call.1} parent=35 // pred_fallthru
          _
        %s287 = sand.u32 %s25, 1
        %s288 = scalar_lea.sflag [#allocation7], %s287
        %s289 = sand.u32 %s99, 1
        %s290 = smul.addr %s289, 128
        %s291 = scalar_lea.vmem [#allocation8], %s290
        // Predicated region
        $region45: #{tpu_custom_call.1} parent=35 // pred_check
          %p292 = pneg %p112
        $region46: #{tpu_custom_call.1} parent=35 // pred_check_branch
          %294 = sbr.rel (%p292) target = $region48
        $region47: #{tpu_custom_call.1} parent=35 // pred_region
          %296 = dma.done %s288, 2048
        $region48: #{tpu_custom_call.1} parent=35 // pred_fallthru
          _
        // Predicated region
        $region49: #{tpu_custom_call.1} parent=35 // pred_check
          %p297 = pneg %p133
        $region50: #{tpu_custom_call.1} parent=35 // pred_check_branch
          %299 = sbr.rel (%p297) target = $region52
        $region51: #{tpu_custom_call.1} parent=35 // pred_region
          %301 = dma.done [#allocation10], 2048
        $region52: #{tpu_custom_call.1} parent=35 // pred_fallthru
          _
        %s302 = sand.u32 %s47, 1
        %s303 = scalar_lea.sflag [#allocation4], %s302
        %s304 = sand.u32 %s47, 1
        %s305 = smul.addr %s304, 128
        %s306 = scalar_lea.vmem [#allocation3], %s305
        %p307 = pneg %p60
        %p308 = pneg %p57
        %s309 = sand.u32 %s25, 1
        %s310 = scalar_lea.sflag [#allocation7], %s309
        %s311 = sand.u32 %s73, 1
        %s312 = smul.addr %s311, 128
        %s313 = scalar_lea.vmem [#allocation6], %s312
        %p314 = pneg %p86
        %p315 = pneg %p83
        %s316 = sand.u32 %s25, 1
        %s317 = scalar_lea.sflag [#allocation7], %s316
        %s318 = sand.u32 %s99, 1
        %s319 = smul.addr %s318, 128
        %s320 = scalar_lea.vmem [#allocation8], %s319
        %p321 = pneg %p112
        %p322 = pneg %p109
        %p323 = pneg %p133
        %p324 = pneg %p130
        %p325 = pneg %p159
        %p326 = pneg %p156
        %s327 = sand.u32 %s146, 1
        %s328 = scalar_lea.sflag [#allocation5], %s327
        %s329 = sand.u32 %s146, 1
        %s330 = smul.addr %s329, 128
        %s331 = scalar_lea.vmem [#allocation11], %s330
        %s332 = smul.u32 16, %s29
        %s333 = smul.u32 16, %s30
        %s334 = smul.u32 16, %s29
        %s335 = smul.u32 16, %s29
        %p336 = scmp.eq.s32.totalorder %s30, 0
        // Predicated region
        $region53: #{tpu_custom_call.1} parent=35 // pred_check
          %p337 = pneg %p336
        $region54: #{tpu_custom_call.1} parent=35 // pred_check_branch
          %339 = sbr.rel (%p337) target = $region56
        $region55: #{tpu_custom_call.1} parent=35 // pred_region
          %340 = vst [vmem:[#allocation2] sm:$0xff] 0.0
          %341 = vst [vmem:[#allocation2 + $0x8] sm:$0xff] 0.0
          %342 = vst [vmem:[#allocation2 + $0x10] sm:$0xff] 0.0
          %343 = vst [vmem:[#allocation2 + $0x18] sm:$0xff] 0.0
          %344 = vst [vmem:[#allocation2 + $0x20] sm:$0xff] 0.0
          %345 = vst [vmem:[#allocation2 + $0x28] sm:$0xff] 0.0
          %346 = vst [vmem:[#allocation2 + $0x30] sm:$0xff] 0.0
          %347 = vst [vmem:[#allocation2 + $0x38] sm:$0xff] 0.0
          %348 = vst [vmem:[#allocation2 + $0x40] sm:$0xff] 0.0
          %349 = vst [vmem:[#allocation2 + $0x48] sm:$0xff] 0.0
          %350 = vst [vmem:[#allocation2 + $0x50] sm:$0xff] 0.0
          %351 = vst [vmem:[#allocation2 + $0x58] sm:$0xff] 0.0
          %352 = vst [vmem:[#allocation2 + $0x60] sm:$0xff] 0.0
          %353 = vst [vmem:[#allocation2 + $0x68] sm:$0xff] 0.0
          %354 = vst [vmem:[#allocation2 + $0x70] sm:$0xff] 0.0
          %355 = vst [vmem:[#allocation2 + $0x78] sm:$0xff] 0.0
        $region56: #{tpu_custom_call.1} parent=35 // pred_fallthru
          _
        %v356 = vld [vmem:[#allocation2] sm:$0xff]
        %v357 = vld [vmem:[#allocation2 + $0x8] sm:$0xff]
        %v358 = vld [vmem:[#allocation2 + $0x10] sm:$0xff]
        %v359 = vld [vmem:[#allocation2 + $0x18] sm:$0xff]
        %v360 = vld [vmem:[#allocation2 + $0x20] sm:$0xff]
        %v361 = vld [vmem:[#allocation2 + $0x28] sm:$0xff]
        %v362 = vld [vmem:[#allocation2 + $0x30] sm:$0xff]
        %v363 = vld [vmem:[#allocation2 + $0x38] sm:$0xff]
        %v364 = vld [vmem:[#allocation2 + $0x40] sm:$0xff]
        %v365 = vld [vmem:[#allocation2 + $0x48] sm:$0xff]
        %v366 = vld [vmem:[#allocation2 + $0x50] sm:$0xff]
        %v367 = vld [vmem:[#allocation2 + $0x58] sm:$0xff]
        %v368 = vld [vmem:[#allocation2 + $0x60] sm:$0xff]
        %v369 = vld [vmem:[#allocation2 + $0x68] sm:$0xff]
        %v370 = vld [vmem:[#allocation2 + $0x70] sm:$0xff]
        %v371 = vld [vmem:[#allocation2 + $0x78] sm:$0xff]
        %v372 = vld [vmem:[%s271] sm:$0xff]
        %v373 = vld [vmem:[%s271 + $0x8] sm:$0xff]
        %v374 = vld [vmem:[%s271 + $0x10] sm:$0xff]
        %v375 = vld [vmem:[%s271 + $0x18] sm:$0xff]
        %v376 = vld [vmem:[%s271 + $0x20] sm:$0xff]
        %v377 = vld [vmem:[%s271 + $0x28] sm:$0xff]
        %v378 = vld [vmem:[%s271 + $0x30] sm:$0xff]
        %v379 = vld [vmem:[%s271 + $0x38] sm:$0xff]
        %v380 = vld [vmem:[%s271 + $0x40] sm:$0xff]
        %v381 = vld [vmem:[%s271 + $0x48] sm:$0xff]
        %v382 = vld [vmem:[%s271 + $0x50] sm:$0xff]
        %v383 = vld [vmem:[%s271 + $0x58] sm:$0xff]
        %v384 = vld [vmem:[%s271 + $0x60] sm:$0xff]
        %v385 = vld [vmem:[%s271 + $0x68] sm:$0xff]
        %v386 = vld [vmem:[%s271 + $0x70] sm:$0xff]
        %v387 = vld [vmem:[%s271 + $0x78] sm:$0xff]
        %v388 = vld [vmem:[%s281] sm:$0xff]
        %v389 = vld [vmem:[%s281 + $0x8] sm:$0xff]
        %v390 = vld [vmem:[%s281 + $0x10] sm:$0xff]
        %v391 = vld [vmem:[%s281 + $0x18] sm:$0xff]
        %v392 = vld [vmem:[%s281 + $0x20] sm:$0xff]
        %v393 = vld [vmem:[%s281 + $0x28] sm:$0xff]
        %v394 = vld [vmem:[%s281 + $0x30] sm:$0xff]
        %v395 = vld [vmem:[%s281 + $0x38] sm:$0xff]
        %v396 = vld [vmem:[%s281 + $0x40] sm:$0xff]
        %v397 = vld [vmem:[%s281 + $0x48] sm:$0xff]
        %v398 = vld [vmem:[%s281 + $0x50] sm:$0xff]
        %v399 = vld [vmem:[%s281 + $0x58] sm:$0xff]
        %v400 = vld [vmem:[%s281 + $0x60] sm:$0xff]
        %v401 = vld [vmem:[%s281 + $0x68] sm:$0xff]
        %v402 = vld [vmem:[%s281 + $0x70] sm:$0xff]
        %v403 = vld [vmem:[%s281 + $0x78] sm:$0xff]
        %404 = vmatpush.msra.mxu0 %v403
        %405 = vmatpush.msra.mxu0 %v402
        %406 = vmatpush.msra.mxu0 %v401
        %407 = vmatpush.msra.mxu0 %v400
        %408 = vmatpush.msra.mxu0 %v399
        %409 = vmatpush.msra.mxu0 %v398
        %410 = vmatpush.msra.mxu0 %v397
        %411 = vmatpush.msra.mxu0 %v396
        %412 = vmatpush.msra.mxu0 %v395
        %413 = vmatpush.msra.mxu0 %v394
        %414 = vmatpush.msra.mxu0 %v393
        %415 = vmatpush.msra.mxu0 %v392
        %416 = vmatpush.msra.mxu0 %v391
        %417 = vmatpush.msra.mxu0 %v390
        %418 = vmatpush.msra.mxu0 %v389
        %419 = vmatpush.msra.mxu0 %v388
        %420 = vmatmul.f32.gmra.mxu0 %v372
        %v421 = vpop.f32.mrf.mxu0
        %v422 = vadd.f32 0.0, %v421
        %423 = vmatmul.f32.gmra.mxu0 %v373
        %v424 = vpop.f32.mrf.mxu0
        %v425 = vadd.f32 0.0, %v424
        %426 = vmatmul.f32.gmra.mxu0 %v374
        %v427 = vpop.f32.mrf.mxu0
        %v428 = vadd.f32 0.0, %v427
        %429 = vmatmul.f32.gmra.mxu0 %v375
        %v430 = vpop.f32.mrf.mxu0
        %v431 = vadd.f32 0.0, %v430
        %432 = vmatmul.f32.gmra.mxu0 %v376
        %v433 = vpop.f32.mrf.mxu0
        %v434 = vadd.f32 0.0, %v433
        %435 = vmatmul.f32.gmra.mxu0 %v377
        %v436 = vpop.f32.mrf.mxu0
        %v437 = vadd.f32 0.0, %v436
        %438 = vmatmul.f32.gmra.mxu0 %v378
        %v439 = vpop.f32.mrf.mxu0
        %v440 = vadd.f32 0.0, %v439
        %441 = vmatmul.f32.gmra.mxu0 %v379
        %v442 = vpop.f32.mrf.mxu0
        %v443 = vadd.f32 0.0, %v442
        %444 = vmatmul.f32.gmra.mxu0 %v380
        %v445 = vpop.f32.mrf.mxu0
        %v446 = vadd.f32 0.0, %v445
        %447 = vmatmul.f32.gmra.mxu0 %v381
        %v448 = vpop.f32.mrf.mxu0
        %v449 = vadd.f32 0.0, %v448
        %450 = vmatmul.f32.gmra.mxu0 %v382
        %v451 = vpop.f32.mrf.mxu0
        %v452 = vadd.f32 0.0, %v451
        %453 = vmatmul.f32.gmra.mxu0 %v383
        %v454 = vpop.f32.mrf.mxu0
        %v455 = vadd.f32 0.0, %v454
        %456 = vmatmul.f32.gmra.mxu0 %v384
        %v457 = vpop.f32.mrf.mxu0
        %v458 = vadd.f32 0.0, %v457
        %459 = vmatmul.f32.gmra.mxu0 %v385
        %v460 = vpop.f32.mrf.mxu0
        %v461 = vadd.f32 0.0, %v460
        %462 = vmatmul.f32.gmra.mxu0 %v386
        %v463 = vpop.f32.mrf.mxu0
        %v464 = vadd.f32 0.0, %v463
        %465 = vmatmul.f32.gmra.mxu0 %v387
        %v466 = vpop.f32.mrf.mxu0
        %v467 = vadd.f32 0.0, %v466
        %468 = vdwg.mxu0
        %v469 = vadd.f32 %v356, %v422
        %v470 = vadd.f32 %v357, %v425
        %v471 = vadd.f32 %v358, %v428
        %v472 = vadd.f32 %v359, %v431
        %v473 = vadd.f32 %v360, %v434
        %v474 = vadd.f32 %v361, %v437
        %v475 = vadd.f32 %v362, %v440
        %v476 = vadd.f32 %v363, %v443
        %v477 = vadd.f32 %v364, %v446
        %v478 = vadd.f32 %v365, %v449
        %v479 = vadd.f32 %v366, %v452
        %v480 = vadd.f32 %v367, %v455
        %v481 = vadd.f32 %v368, %v458
        %v482 = vadd.f32 %v369, %v461
        %v483 = vadd.f32 %v370, %v464
        %v484 = vadd.f32 %v371, %v467
        %485 = vst [vmem:[#allocation2] sm:$0xff] %v469
        %486 = vst [vmem:[#allocation2 + $0x8] sm:$0xff] %v470
        %487 = vst [vmem:[#allocation2 + $0x10] sm:$0xff] %v471
        %488 = vst [vmem:[#allocation2 + $0x18] sm:$0xff] %v472
        %489 = vst [vmem:[#allocation2 + $0x20] sm:$0xff] %v473
        %490 = vst [vmem:[#allocation2 + $0x28] sm:$0xff] %v474
        %491 = vst [vmem:[#allocation2 + $0x30] sm:$0xff] %v475
        %492 = vst [vmem:[#allocation2 + $0x38] sm:$0xff] %v476
        %493 = vst [vmem:[#allocation2 + $0x40] sm:$0xff] %v477
        %494 = vst [vmem:[#allocation2 + $0x48] sm:$0xff] %v478
        %495 = vst [vmem:[#allocation2 + $0x50] sm:$0xff] %v479
        %496 = vst [vmem:[#allocation2 + $0x58] sm:$0xff] %v480
        %497 = vst [vmem:[#allocation2 + $0x60] sm:$0xff] %v481
        %498 = vst [vmem:[#allocation2 + $0x68] sm:$0xff] %v482
        %499 = vst [vmem:[#allocation2 + $0x70] sm:$0xff] %v483
        %500 = vst [vmem:[#allocation2 + $0x78] sm:$0xff] %v484
        %p501 = scmp.eq.s32.totalorder %s30, 1
        // Predicated region
        $region57: #{tpu_custom_call.1} parent=35 // pred_check
          %p502 = pneg %p501
        $region58: #{tpu_custom_call.1} parent=35 // pred_check_branch
          %504 = sbr.rel (%p502) target = $region60
        $region59: #{tpu_custom_call.1} parent=35 // pred_region
          %v505 = vld [vmem:[#allocation2] sm:$0xff]
          %v506 = vld [vmem:[#allocation2 + $0x8] sm:$0xff]
          %v507 = vld [vmem:[#allocation2 + $0x10] sm:$0xff]
          %v508 = vld [vmem:[#allocation2 + $0x18] sm:$0xff]
          %v509 = vld [vmem:[#allocation2 + $0x20] sm:$0xff]
          %v510 = vld [vmem:[#allocation2 + $0x28] sm:$0xff]
          %v511 = vld [vmem:[#allocation2 + $0x30] sm:$0xff]
          %v512 = vld [vmem:[#allocation2 + $0x38] sm:$0xff]
          %v513 = vld [vmem:[#allocation2 + $0x40] sm:$0xff]
          %v514 = vld [vmem:[#allocation2 + $0x48] sm:$0xff]
          %v515 = vld [vmem:[#allocation2 + $0x50] sm:$0xff]
          %v516 = vld [vmem:[#allocation2 + $0x58] sm:$0xff]
          %v517 = vld [vmem:[#allocation2 + $0x60] sm:$0xff]
          %v518 = vld [vmem:[#allocation2 + $0x68] sm:$0xff]
          %v519 = vld [vmem:[#allocation2 + $0x70] sm:$0xff]
          %v520 = vld [vmem:[#allocation2 + $0x78] sm:$0xff]
          %v521 = vmul.f32 %v505, 0.9
          %v522 = vmul.f32 %v506, 0.9
          %v523 = vmul.f32 %v507, 0.9
          %v524 = vmul.f32 %v508, 0.9
          %v525 = vmul.f32 %v509, 0.9
          %v526 = vmul.f32 %v510, 0.9
          %v527 = vmul.f32 %v511, 0.9
          %v528 = vmul.f32 %v512, 0.9
          %v529 = vmul.f32 %v513, 0.9
          %v530 = vmul.f32 %v514, 0.9
          %v531 = vmul.f32 %v515, 0.9
          %v532 = vmul.f32 %v516, 0.9
          %v533 = vmul.f32 %v517, 0.9
          %v534 = vmul.f32 %v518, 0.9
          %v535 = vmul.f32 %v519, 0.9
          %v536 = vmul.f32 %v520, 0.9
          %v537 = vld [vmem:[%s291] sm:$0xff]
          %v538 = vld [vmem:[%s291 + $0x8] sm:$0xff]
          %v539 = vld [vmem:[%s291 + $0x10] sm:$0xff]
          %v540 = vld [vmem:[%s291 + $0x18] sm:$0xff]
          %v541 = vld [vmem:[%s291 + $0x20] sm:$0xff]
          %v542 = vld [vmem:[%s291 + $0x28] sm:$0xff]
          %v543 = vld [vmem:[%s291 + $0x30] sm:$0xff]
          %v544 = vld [vmem:[%s291 + $0x38] sm:$0xff]
          %v545 = vld [vmem:[%s291 + $0x40] sm:$0xff]
          %v546 = vld [vmem:[%s291 + $0x48] sm:$0xff]
          %v547 = vld [vmem:[%s291 + $0x50] sm:$0xff]
          %v548 = vld [vmem:[%s291 + $0x58] sm:$0xff]
          %v549 = vld [vmem:[%s291 + $0x60] sm:$0xff]
          %v550 = vld [vmem:[%s291 + $0x68] sm:$0xff]
          %v551 = vld [vmem:[%s291 + $0x70] sm:$0xff]
          %v552 = vld [vmem:[%s291 + $0x78] sm:$0xff]
          %v553 = vmul.f32 %v537, 0.1
          %v554 = vmul.f32 %v538, 0.1
          %v555 = vmul.f32 %v539, 0.1
          %v556 = vmul.f32 %v540, 0.1
          %v557 = vmul.f32 %v541, 0.1
          %v558 = vmul.f32 %v542, 0.1
          %v559 = vmul.f32 %v543, 0.1
          %v560 = vmul.f32 %v544, 0.1
          %v561 = vmul.f32 %v545, 0.1
          %v562 = vmul.f32 %v546, 0.1
          %v563 = vmul.f32 %v547, 0.1
          %v564 = vmul.f32 %v548, 0.1
          %v565 = vmul.f32 %v549, 0.1
          %v566 = vmul.f32 %v550, 0.1
          %v567 = vmul.f32 %v551, 0.1
          %v568 = vmul.f32 %v552, 0.1
          %v569 = vadd.f32 %v521, %v553
          %v570 = vadd.f32 %v522, %v554
          %v571 = vadd.f32 %v523, %v555
          %v572 = vadd.f32 %v524, %v556
          %v573 = vadd.f32 %v525, %v557
          %v574 = vadd.f32 %v526, %v558
          %v575 = vadd.f32 %v527, %v559
          %v576 = vadd.f32 %v528, %v560
          %v577 = vadd.f32 %v529, %v561
          %v578 = vadd.f32 %v530, %v562
          %v579 = vadd.f32 %v531, %v563
          %v580 = vadd.f32 %v532, %v564
          %v581 = vadd.f32 %v533, %v565
          %v582 = vadd.f32 %v534, %v566
          %v583 = vadd.f32 %v535, %v567
          %v584 = vadd.f32 %v536, %v568
          %v585 = vld [vmem:[#allocation9] sm:$0xff]
          %v586 = vld [vmem:[#allocation9 + $0x8] sm:$0xff]
          %v587 = vld [vmem:[#allocation9 + $0x10] sm:$0xff]
          %v588 = vld [vmem:[#allocation9 + $0x18] sm:$0xff]
          %v589 = vld [vmem:[#allocation9 + $0x20] sm:$0xff]
          %v590 = vld [vmem:[#allocation9 + $0x28] sm:$0xff]
          %v591 = vld [vmem:[#allocation9 + $0x30] sm:$0xff]
          %v592 = vld [vmem:[#allocation9 + $0x38] sm:$0xff]
          %v593 = vld [vmem:[#allocation9 + $0x40] sm:$0xff]
          %v594 = vld [vmem:[#allocation9 + $0x48] sm:$0xff]
          %v595 = vld [vmem:[#allocation9 + $0x50] sm:$0xff]
          %v596 = vld [vmem:[#allocation9 + $0x58] sm:$0xff]
          %v597 = vld [vmem:[#allocation9 + $0x60] sm:$0xff]
          %v598 = vld [vmem:[#allocation9 + $0x68] sm:$0xff]
          %v599 = vld [vmem:[#allocation9 + $0x70] sm:$0xff]
          %v600 = vld [vmem:[#allocation9 + $0x78] sm:$0xff]
          %v601 = vmul.f32 %v569, 0.5945349
          %v602 = vmul.f32 %v570, 0.5945349
          %v603 = vmul.f32 %v571, 0.5945349
          %v604 = vmul.f32 %v572, 0.5945349
          %v605 = vmul.f32 %v573, 0.5945349
          %v606 = vmul.f32 %v574, 0.5945349
          %v607 = vmul.f32 %v575, 0.5945349
          %v608 = vmul.f32 %v576, 0.5945349
          %v609 = vmul.f32 %v577, 0.5945349
          %v610 = vmul.f32 %v578, 0.5945349
          %v611 = vmul.f32 %v579, 0.5945349
          %v612 = vmul.f32 %v580, 0.5945349
          %v613 = vmul.f32 %v581, 0.5945349
          %v614 = vmul.f32 %v582, 0.5945349
          %v615 = vmul.f32 %v583, 0.5945349
          %v616 = vmul.f32 %v584, 0.5945349
          %617 = vmatpush.msra.mxu0 %v600
          %618 = vmatpush.msra.mxu0 %v599
          %619 = vmatpush.msra.mxu0 %v598
          %620 = vmatpush.msra.mxu0 %v597
          %621 = vmatpush.msra.mxu0 %v596
          %622 = vmatpush.msra.mxu0 %v595
          %623 = vmatpush.msra.mxu0 %v594
          %624 = vmatpush.msra.mxu0 %v593
          %625 = vmatpush.msra.mxu0 %v592
          %626 = vmatpush.msra.mxu0 %v591
          %627 = vmatpush.msra.mxu0 %v590
          %628 = vmatpush.msra.mxu0 %v589
          %629 = vmatpush.msra.mxu0 %v588
          %630 = vmatpush.msra.mxu0 %v587
          %631 = vmatpush.msra.mxu0 %v586
          %632 = vmatpush.msra.mxu0 %v585
          %633 = vmatmul.f32.gmra.mxu0 %v569
          %v634 = vpop.f32.mrf.mxu0
          %v635 = vadd.f32 %v601, %v634
          %636 = vmatmul.f32.gmra.mxu0 %v570
          %v637 = vpop.f32.mrf.mxu0
          %v638 = vadd.f32 %v602, %v637
          %639 = vmatmul.f32.gmra.mxu0 %v571
          %v640 = vpop.f32.mrf.mxu0
          %v641 = vadd.f32 %v603, %v640
          %642 = vmatmul.f32.gmra.mxu0 %v572
          %v643 = vpop.f32.mrf.mxu0
          %v644 = vadd.f32 %v604, %v643
          %645 = vmatmul.f32.gmra.mxu0 %v573
          %v646 = vpop.f32.mrf.mxu0
          %v647 = vadd.f32 %v605, %v646
          %648 = vmatmul.f32.gmra.mxu0 %v574
          %v649 = vpop.f32.mrf.mxu0
          %v650 = vadd.f32 %v606, %v649
          %651 = vmatmul.f32.gmra.mxu0 %v575
          %v652 = vpop.f32.mrf.mxu0
          %v653 = vadd.f32 %v607, %v652
          %654 = vmatmul.f32.gmra.mxu0 %v576
          %v655 = vpop.f32.mrf.mxu0
          %v656 = vadd.f32 %v608, %v655
          %657 = vmatmul.f32.gmra.mxu0 %v577
          %v658 = vpop.f32.mrf.mxu0
          %v659 = vadd.f32 %v609, %v658
          %660 = vmatmul.f32.gmra.mxu0 %v578
          %v661 = vpop.f32.mrf.mxu0
          %v662 = vadd.f32 %v610, %v661
          %663 = vmatmul.f32.gmra.mxu0 %v579
          %v664 = vpop.f32.mrf.mxu0
          %v665 = vadd.f32 %v611, %v664
          %666 = vmatmul.f32.gmra.mxu0 %v580
          %v667 = vpop.f32.mrf.mxu0
          %v668 = vadd.f32 %v612, %v667
          %669 = vmatmul.f32.gmra.mxu0 %v581
          %v670 = vpop.f32.mrf.mxu0
          %v671 = vadd.f32 %v613, %v670
          %672 = vmatmul.f32.gmra.mxu0 %v582
          %v673 = vpop.f32.mrf.mxu0
          %v674 = vadd.f32 %v614, %v673
          %675 = vmatmul.f32.gmra.mxu0 %v583
          %v676 = vpop.f32.mrf.mxu0
          %v677 = vadd.f32 %v615, %v676
          %678 = vmatmul.f32.gmra.mxu0 %v584
          %v679 = vpop.f32.mrf.mxu0
          %v680 = vadd.f32 %v616, %v679
          %681 = vdwg.mxu0
          %v682 = vtanh.pop %v635
          %v683 = vtanh.pop %v638
          %v684 = vtanh.pop %v641
          %v685 = vtanh.pop %v644
          %v686 = vtanh.pop %v647
          %v687 = vtanh.pop %v650
          %v688 = vtanh.pop %v653
          %v689 = vtanh.pop %v656
          %v690 = vtanh.pop %v659
          %v691 = vtanh.pop %v662
          %v692 = vtanh.pop %v665
          %v693 = vtanh.pop %v668
          %v694 = vtanh.pop %v671
          %v695 = vtanh.pop %v674
          %v696 = vtanh.pop %v677
          %v697 = vtanh.pop %v680
          %698 = vst [vmem:[%s331] sm:$0xff] %v682
          %699 = vst [vmem:[%s331 + $0x8] sm:$0xff] %v683
          %700 = vst [vmem:[%s331 + $0x10] sm:$0xff] %v684
          %701 = vst [vmem:[%s331 + $0x18] sm:$0xff] %v685
          %702 = vst [vmem:[%s331 + $0x20] sm:$0xff] %v686
          %703 = vst [vmem:[%s331 + $0x28] sm:$0xff] %v687
          %704 = vst [vmem:[%s331 + $0x30] sm:$0xff] %v688
          %705 = vst [vmem:[%s331 + $0x38] sm:$0xff] %v689
          %706 = vst [vmem:[%s331 + $0x40] sm:$0xff] %v690
          %707 = vst [vmem:[%s331 + $0x48] sm:$0xff] %v691
          %708 = vst [vmem:[%s331 + $0x50] sm:$0xff] %v692
          %709 = vst [vmem:[%s331 + $0x58] sm:$0xff] %v693
          %710 = vst [vmem:[%s331 + $0x60] sm:$0xff] %v694
          %711 = vst [vmem:[%s331 + $0x68] sm:$0xff] %v695
          %712 = vst [vmem:[%s331 + $0x70] sm:$0xff] %v696
          %713 = vst [vmem:[%s331 + $0x78] sm:$0xff] %v697
        $region60: #{tpu_custom_call.1} parent=35 // pred_fallthru
          _
        %s714 = sand.u32 %s146, 1
        %s715 = scalar_lea.sflag [#allocation5], %s714
        %s716 = sand.u32 %s146, 1
        %s717 = smul.addr %s716, 128
        %s718 = scalar_lea.vmem [#allocation11], %s717
        // Predicated region
        $region61: #{tpu_custom_call.1} parent=35 // pred_check
          %p719 = pneg %p156
        $region62: #{tpu_custom_call.1} parent=35 // pred_check_branch
          %721 = sbr.rel (%p719) target = $region64
        $region63: #{tpu_custom_call.1} parent=35 // pred_region
          %s722 = smul.u32 16, %s29
          %724 = vsyncadd %s715, 0
          %s725 = smul.addr %s722, 8
          %s726 = scalar_lea.hbm %s4, %s725
          %s727 = sshll.u32 %s718, 4
          %s728 = int_to_ptr.vmem [resolvable:$true] %s727
          %s729 = sshll.u32 %s726, 4
          %s730 = int_to_ptr.hbm [resolvable:$true] %s729
          %735 = dma.vmem_to_hbm [thread:$0]  %s728, 2048, %s730, %s715, 128, 128, 8
        $region64: #{tpu_custom_call.1} parent=35 // pred_fallthru
          _
      $region36: #{tpu_custom_call.1} parent=5 // pred_fallthru
        _
      %p736 = scmp.le.s32.totalorder 2, %s20
      // Predicated region
      $region65: #{tpu_custom_call.1} parent=5 // pred_check
        %p737 = pneg %p736
      $region66: #{tpu_custom_call.1} parent=5 // pred_check_branch
        %739 = sbr.rel (%p737) target = $region68
      $region67: #{tpu_custom_call.1} parent=5 // pred_region
        %s740 = ssub.s32 %s20, 2
        // Predicated region
        $region69: #{tpu_custom_call.1} parent=67 // pred_check
          %p741 = pneg %p162
        $region70: #{tpu_custom_call.1} parent=67 // pred_check_branch
          %743 = sbr.rel (%p741) target = $region72
        $region71: #{tpu_custom_call.1} parent=67 // pred_region
          %s744 = sand.u32 %s147, 1
          %s745 = scalar_lea.sflag [#allocation5], %s744
          %s746 = sand.u32 %s147, 1
          %s747 = smul.addr %s746, 128
          %s748 = scalar_lea.vmem [#allocation11], %s747
          %750 = dma.done %s745, 2048
        $region72: #{tpu_custom_call.1} parent=67 // pred_fallthru
          _
      $region68: #{tpu_custom_call.1} parent=5 // pred_fallthru
        _
    $region6: #{tpu_custom_call.1} parent=1 // loop_footer
      %s24 = sadd.s32 1, %s20
    $region7: #{tpu_custom_call.1} parent=1 // loop_footer_branch
      %19 = sbr.rel target = $region3
    $region8: #{tpu_custom_call.1} parent=1 // loop_exit
      _
    %751 = vsyncpa [#allocation4], 1
    %s752 = scalar_lea.sflag [#allocation4], 1
    %753 = vsyncpa %s752, 1
    %754 = vsyncpa [#allocation7], 1
    %s755 = scalar_lea.sflag [#allocation7], 1
    %756 = vsyncpa %s755, 1
    %757 = vsyncpa [#allocation10], 1
    %758 = vsyncpa [#allocation5], 1
    %s759 = scalar_lea.sflag [#allocation5], 1
    %760 = vsyncpa %s759, 1

</llo_original>
